<compile_context>
chip_gen: v6e
topology: v6e:2x2x1
jax: 0.10.0
libtpu: 0.0.40
codegen_flags: <defaults>
</compile_context>

<pallas_src>
import jax
import jax.numpy as jnp
from jax.experimental import pallas as pl
from jax.experimental.pallas import tpu as pltpu


def _round_up(x, m):
    return ((x + m - 1) // m) * m


def _vmem_capacity_bytes():
    # Trace-time hardware query; conservative (v7x-sized) fallback if it fails.
    try:
        return int(pltpu.get_tpu_info().vmem_capacity_bytes)
    except Exception:
        return 64 << 20


def _pretrain_head_kernel(x_ref, w_ref, b_ref, o_ref):
    # x_ref: (rows_blk, G*D)  w_ref: (G*D, G*L)  b_ref: (1, G*L)  o_ref: (rows_blk, G*L)
    acc = jnp.dot(x_ref[...], w_ref[...], preferred_element_type=jnp.float32)
    o_ref[...] = (acc + b_ref[...]).astype(o_ref.dtype)


def pretrain_head(x, weight, bias, *, out_dtype=None):
    """PretrainHead forward (eval mode).

    x: (B, C, P, D); weight: (L, D) (torch nn.Linear layout); bias: (L,).
    Returns (B, C, P*L).  Streams x in its native dtype (pass bf16 x for the
    half-bandwidth path); accumulation is always f32.
    """
    B, C, P, D = x.shape
    L, Dw = weight.shape
    assert D == Dw, "weight must be (patch_len, d_model)"
    M = B * C * P
    out_dtype = jnp.dtype(out_dtype) if out_dtype is not None else jnp.dtype(x.dtype)
    in_itemsize = jnp.dtype(x.dtype).itemsize
    out_itemsize = out_dtype.itemsize

    # ---- generation-branched budgets ------------------------------------
    vmem_cap = _vmem_capacity_bytes()
    small_vmem = vmem_cap < (96 << 20)             # v7x: 64 MiB per TensorCore
    vmem_req_cap = (48 << 20) if small_vmem else (96 << 20)
    act_buf_bytes = (8 << 20) if small_vmem else (16 << 20)   # per pipeline buffer
    min_steps = 4 if small_vmem else 2             # v7x: 2 TCs + double buffering

    # ---- lane-dense output grouping --------------------------------------
    group = 128 // L if (0 < L < 128 and 128 % L == 0) else 1
    if group > 1:
        # Resident block-diagonal weight cost (double-buffered by default);
        # keep it under ~25% of the VMEM request or fall back.
        w_buf_bytes = (group * D) * _round_up(group * L, 128) * in_itemsize
        if 2 * w_buf_bytes > vmem_req_cap // 4:
            # TODO(synk): fallback path stores L-wide (lane-sparse) rows.
            group = 1

    cols_in = group * D
    cols_out = group * L

    # ---- pad M only to a multiple of the group (<= group-1 zero rows) ----
    # Common case (M % group == 0) is completely copy-free.
    M_pad = _round_up(M, group)
    x2 = x.reshape(M, D)
    if M_pad != M:
        x2 = jnp.pad(x2, ((0, M_pad - M), (0, 0)))
    g_rows = M_pad // group
    x_in = x2.reshape(g_rows, cols_in)             # free row-major reshape

    w_t = weight.T.astype(x.dtype)                 # (D, L); tiny one-off cast
    if group > 1:
        w_eff = jnp.kron(jnp.eye(group, dtype=w_t.dtype), w_t)   # (G*D, G*L)
        b_eff = jnp.tile(bias.astype(jnp.float32), group)
    else:
        w_eff = w_t
        b_eff = bias.astype(jnp.float32)
    b_in = b_eff.reshape(1, cols_out)

    # ---- auto row tile: VMEM-budgeted, keep >= min_steps grid steps -------
    row_bytes = _round_up(cols_in, 128) * in_itemsize
    budget_rows = max(8, (act_buf_bytes // row_bytes) // 8 * 8)
    steps_cap = _round_up(pl.cdiv(g_rows, min_steps), 8)
    rows_blk = min(budget_rows, steps_cap)
    if rows_blk >= g_rows:
        rows_blk = g_rows                          # single full-extent block
    grid = (pl.cdiv(g_rows, rows_blk),)            # last block may be partial

    # ---- explicit scoped-VMEM request (actual need + headroom, capped) ----
    x_buf = rows_blk * _round_up(cols_in, 128) * in_itemsize
    w_buf = _round_up(cols_in, 8) * _round_up(cols_out, 128) * in_itemsize
    o_buf = rows_blk * _round_up(cols_out, 128) * out_itemsize
    bias_buf = 8 * _round_up(cols_out, 128) * 4
    need = 2 * (x_buf + w_buf + o_buf + bias_buf) + (8 << 20)
    vmem_limit = int(min(vmem_req_cap, max(need, 32 << 20)))

    cost = pl.CostEstimate(
        flops=2 * M * D * L,
        transcendentals=0,
        bytes_accessed=int(x_in.size * in_itemsize
                           + w_eff.size * in_itemsize
                           + g_rows * cols_out * out_itemsize),
    )

    out_dense = pl.pallas_call(
        _pretrain_head_kernel,
        out_shape=jax.ShapeDtypeStruct((g_rows, cols_out), out_dtype),
        grid=grid,
        in_specs=[
            pl.BlockSpec((rows_blk, cols_in), lambda i: (i, 0)),   # streamed acts
            pl.BlockSpec((cols_in, cols_out), lambda i: (0, 0)),   # resident weight
            pl.BlockSpec((1, cols_out), lambda i: (0, 0)),         # resident bias
        ],
        out_specs=pl.BlockSpec((rows_blk, cols_out), lambda i: (i, 0)),
        compiler_params=pltpu.CompilerParams(
            dimension_semantics=("parallel",),
            vmem_limit_bytes=vmem_limit,
        ),
        cost_estimate=cost,
    )(x_in, w_eff, b_in)

    # (g_rows, G*L) and (M_pad, L) are the same row-major bytes.
    out2 = out_dense.reshape(M_pad, L)
    if M_pad != M:
        out2 = out2[:M]
    return out2.reshape(B, C, P * L)


if __name__ == "__main__":
    def ref_fn(x, w, b):
        B, C, P, _ = x.shape
        L = w.shape[0]
        return (x @ w.T + b).reshape(B, C, P * L)

    key = jax.random.PRNGKey(0)
    k1, k2, k3 = jax.random.split(key, 3)

    # Small shapes consistent with the module (d_model=32, patch_len=8).
    B, C, P, D, L = 2, 4, 8, 32, 8
    x = jax.random.normal(k1, (B, C, P, D), dtype=jnp.float32)
    # Deterministic params mirroring __init__: orthogonal_(weight, gain=1.41), zero bias.
    weight = jax.nn.initializers.orthogonal(scale=1.41)(k2, (L, D), jnp.float32)
    bias = jnp.zeros((L,), dtype=jnp.float32)

    out = jax.block_until_ready(pretrain_head(x, weight, bias))
    ref = ref_fn(x, weight, bias)
    assert out.shape == (B, C, P * L)
    assert jnp.allclose(out, ref, atol=1e-5, rtol=1e-5)

    # Row count not a multiple of the group -> exercises the small-pad tail path.
    B2, C2, P2 = 2, 3, 7
    x_b = jax.random.normal(k3, (B2, C2, P2, D), dtype=jnp.float32)
    out_b = jax.block_until_ready(pretrain_head(x_b, weight, bias))
    ref_b = ref_fn(x_b, weight, bias)
    assert out_b.shape == (B2, C2, P2 * L)
    assert jnp.allclose(out_b, ref_b, atol=1e-5, rtol=1e-5)

    # Natively-bf16 activations stream at half bandwidth; f32 accumulation.
    x_bf16 = x.astype(jnp.bfloat16)
    out_c = jax.block_until_ready(pretrain_head(x_bf16, weight, bias))
    assert out_c.dtype == jnp.bfloat16
    assert jnp.allclose(out_c.astype(jnp.float32), ref, atol=5e-2, rtol=5e-2)

    print("KERNEL_OK")
</pallas_src>

<mosaic_0001>
module attributes {stable_mosaic.version = 11 : i64} {
  func.func @_pretrain_head_kernel(%arg0: i32, %arg1: memref<4x512xf32, #tpu.memory_space<vmem>>, %arg2: memref<512x128xf32, #tpu.memory_space<vmem>>, %arg3: memref<1x128xf32, #tpu.memory_space<vmem>>, %arg4: memref<4x128xf32, #tpu.memory_space<vmem>>) attributes {dimension_semantics = [#tpu.dimension_semantics<parallel>], iteration_bounds = array<i64: 1>, scalar_prefetch = 0 : i64, scratch_operands = 0 : i64, tpu.core_type = #tpu.core_type<tc>, window_params = [{transform_indices = @transform_0, window_bounds = array<i64: 4, 512>}, {pipeline_mode = #tpu.pipeline_mode<synchronous>, transform_indices = @transform_1, window_bounds = array<i64: 512, 128>}, {pipeline_mode = #tpu.pipeline_mode<synchronous>, transform_indices = @transform_2, window_bounds = array<i64: 1, 128>}, {transform_indices = @transform_3, window_bounds = array<i64: 4, 128>}]} {
    %c0 = arith.constant 0 : index
    %c0_0 = arith.constant 0 : index
    %0 = vector.load %arg1[%c0, %c0_0] : memref<4x512xf32, #tpu.memory_space<vmem>>, vector<4x512xf32>
    %c0_1 = arith.constant 0 : index
    %c0_2 = arith.constant 0 : index
    %1 = vector.load %arg2[%c0_1, %c0_2] : memref<512x128xf32, #tpu.memory_space<vmem>>, vector<512x128xf32>
    %cst = arith.constant dense<0.000000e+00> : vector<4x128xf32>
    %2 = tpu.matmul %0, %1, %cst {dimension_numbers = #tpu.dot_dimension_numbers<[1], [0], [0], [1], [0, 0, 1, 1], [], []>} : vector<4x512xf32>, vector<512x128xf32>, vector<4x128xf32> -> vector<4x128xf32>
    %c0_3 = arith.constant 0 : index
    %c0_4 = arith.constant 0 : index
    %3 = vector.load %arg3[%c0_3, %c0_4] : memref<1x128xf32, #tpu.memory_space<vmem>>, vector<1x128xf32>
    %4 = vector.broadcast %3 : vector<1x128xf32> to vector<4x128xf32>
    %5 = arith.addf %2, %4 : vector<4x128xf32>
    %c0_5 = arith.constant 0 : index
    %c0_6 = arith.constant 0 : index
    %6 = vector.load %arg4[%c0_5, %c0_6] : memref<4x128xf32, #tpu.memory_space<vmem>>, vector<4x128xf32>
    tpu.vector_store %arg4[%c0_5, %c0_6], %5 {strides = array<i32>} : memref<4x128xf32, #tpu.memory_space<vmem>>, vector<4x128xf32>,
    return
  }
  func.func @transform_0(%arg0: i32) -> (i32, i32) {
    %c0_i32 = arith.constant 0 : i32
    %c0_i32_0 = arith.constant 0 : i32
    return %arg0, %c0_i32 : i32, i32
  }
  func.func @transform_1(%arg0: i32) -> (i32, i32) {
    %c0_i32 = arith.constant 0 : i32
    %c0_i32_0 = arith.constant 0 : i32
    %c0_i32_1 = arith.constant 0 : i32
    return %c0_i32, %c0_i32_0 : i32, i32
  }
  func.func @transform_2(%arg0: i32) -> (i32, i32) {
    %c0_i32 = arith.constant 0 : i32
    %c0_i32_0 = arith.constant 0 : i32
    %c0_i32_1 = arith.constant 0 : i32
    return %c0_i32, %c0_i32_0 : i32, i32
  }
  func.func @transform_3(%arg0: i32) -> (i32, i32) {
    %c0_i32 = arith.constant 0 : i32
    %c0_i32_0 = arith.constant 0 : i32
    return %arg0, %c0_i32 : i32, i32
  }
}

</mosaic_0001>

<llo_original>
// kernel: tpu_custom_call.1
$region0: #{tpu_custom_call.1}
  #allocation0 [shape = 'u32[]', space=smem, size = 0x4, offset = 0x4, fixed_abs, tag = 'smem constant byte address 0x4 - core index']
  #allocation1 [shape = 'u32[144,128]{1,0:T(1,128)}', space=vmem, size = 0x12000, scoped, tag = 'internal scratch']
  %s0 = inlined_call_operand.hbm [shape: f32[4,512], index: 0, kind: input, shape index: {}]
  %s1 = inlined_call_operand.hbm [shape: f32[512,128], index: 1, kind: input, shape index: {}]
  %s2 = inlined_call_operand.vmem [shape: f32[1,128], index: 2, kind: input, shape index: {}]
  %s3 = inlined_call_operand.hbm [shape: f32[4,128], index: 3, kind: output, shape index: {}]
  %s4 = sld [smem:[#allocation0]]
  $region30: #{tpu_custom_call.1} parent=0
    _
  %s6 = ssub.s32 1, %s4
  %s7 = scalar_select 0, %s6, %s4
  $region1: #{tpu_custom_call.1} parent=0
    #allocation2 [shape = 'u8[8192]{0}', space=vmem, size = 0x2000, scoped, tag = 'input window, operand 0, single buffered']
    #allocation3 [shape = 's32[1]{0}', space=sflag, size = 0x4, scoped, tag = 'scoped memory for tpu_custom_call.1']
    #allocation4 [shape = 's32[1]{0}', space=sflag, size = 0x4, scoped, tag = 'scoped memory for tpu_custom_call.1']
    #allocation5 [shape = 'u8[262144]{0}', space=vmem, size = 0x40000, scoped, tag = 'input window, operand 1, single buffered']
    #allocation6 [shape = 's32[1]{0}', space=sflag, size = 0x4, scoped, tag = 'scoped memory for tpu_custom_call.1']
    #allocation7 [shape = 'u8[2048]{0}', space=vmem, size = 0x800, scoped, tag = 'output window, operand 0, single buffered']
    %8 = vsyncpa [#allocation3], 0
    %9 = vsyncpa [#allocation6], 0
    %10 = vsyncpa [#allocation4], 0
    // Predicated region
    $region2: #{tpu_custom_call.1} parent=1 // pred_check
      _
    $region3: #{tpu_custom_call.1} parent=1 // pred_check_branch
      %12 = sbr.rel (0) target = $region5
    $region4: #{tpu_custom_call.1} parent=1 // pred_region
      %s14 = ssub.s32 256, 256
      %15 = vsyncadd [#allocation3], %s14
      %s17 = sshll.u32 [#allocation2], 4
      %s18 = int_to_ptr.vmem [resolvable:$true] %s17
      %20 = dma.hbm_to_vmem [thread:$0]  %s0, 256, %s18, [#allocation3]
    $region5: #{tpu_custom_call.1} parent=1 // pred_fallthru
      _
    // Predicated region
    $region6: #{tpu_custom_call.1} parent=1 // pred_check
      _
    $region7: #{tpu_custom_call.1} parent=1 // pred_check_branch
      %22 = sbr.rel (0) target = $region9
    $region8: #{tpu_custom_call.1} parent=1 // pred_region
      %s24 = ssub.s32 8192, 8192
      %25 = vsyncadd [#allocation6], %s24
      %s26 = sshll.u32 [#allocation5], 4
      %s27 = int_to_ptr.vmem [resolvable:$true] %s26
      %32 = dma.hbm_to_vmem [thread:$0]  %s1, 8192, %s27, [#allocation6], 128, 128, 8
    $region9: #{tpu_custom_call.1} parent=1 // pred_fallthru
      _
    // Predicated region
    $region10: #{tpu_custom_call.1} parent=1 // pred_check
      _
    $region11: #{tpu_custom_call.1} parent=1 // pred_check_branch
      %34 = sbr.rel (0) target = $region13
    $region12: #{tpu_custom_call.1} parent=1 // pred_region
      _
    $region13: #{tpu_custom_call.1} parent=1 // pred_fallthru
      _
    // Predicated region
    $region14: #{tpu_custom_call.1} parent=1 // pred_check
      _
    $region15: #{tpu_custom_call.1} parent=1 // pred_check_branch
      %36 = sbr.rel (0) target = $region17
    $region16: #{tpu_custom_call.1} parent=1 // pred_region
      %37 = dma.done [#allocation3], 256
    $region17: #{tpu_custom_call.1} parent=1 // pred_fallthru
      _
    // Predicated region
    $region18: #{tpu_custom_call.1} parent=1 // pred_check
      _
    $region19: #{tpu_custom_call.1} parent=1 // pred_check_branch
      %39 = sbr.rel (0) target = $region21
    $region20: #{tpu_custom_call.1} parent=1 // pred_region
      %40 = dma.done [#allocation6], 8192
    $region21: #{tpu_custom_call.1} parent=1 // pred_fallthru
      _
    %v41 = vld [vmem:[#allocation2] sm:$0xff]
    %v42 = vld [vmem:[#allocation2 + $0x8] sm:$0xff]
    %v43 = vld [vmem:[#allocation5] sm:$0xff]
    %v44 = vld [vmem:[#allocation5 + $0x8] sm:$0xff]
    %v45 = vld [vmem:[#allocation5 + $0x10] sm:$0xff]
    %v46 = vld [vmem:[#allocation5 + $0x18] sm:$0xff]
    %v47 = vld [vmem:[#allocation5 + $0x20] sm:$0xff]
    %v48 = vld [vmem:[#allocation5 + $0x28] sm:$0xff]
    %v49 = vld [vmem:[#allocation5 + $0x30] sm:$0xff]
    %v50 = vld [vmem:[#allocation5 + $0x38] sm:$0xff]
    %v51 = vld [vmem:[#allocation5 + $0x40] sm:$0xff]
    %v52 = vld [vmem:[#allocation5 + $0x48] sm:$0xff]
    %v53 = vld [vmem:[#allocation5 + $0x50] sm:$0xff]
    %v54 = vld [vmem:[#allocation5 + $0x58] sm:$0xff]
    %v55 = vld [vmem:[#allocation5 + $0x60] sm:$0xff]
    %v56 = vld [vmem:[#allocation5 + $0x68] sm:$0xff]
    %v57 = vld [vmem:[#allocation5 + $0x70] sm:$0xff]
    %v58 = vld [vmem:[#allocation5 + $0x78] sm:$0xff]
    %v59 = vld [vmem:[#allocation5 + $0x80] sm:$0xff]
    %v60 = vld [vmem:[#allocation5 + $0x88] sm:$0xff]
    %v61 = vld [vmem:[#allocation5 + $0x90] sm:$0xff]
    %v62 = vld [vmem:[#allocation5 + $0x98] sm:$0xff]
    %v63 = vld [vmem:[#allocation5 + $0xa0] sm:$0xff]
    %v64 = vld [vmem:[#allocation5 + $0xa8] sm:$0xff]
    %v65 = vld [vmem:[#allocation5 + $0xb0] sm:$0xff]
    %v66 = vld [vmem:[#allocation5 + $0xb8] sm:$0xff]
    %v67 = vld [vmem:[#allocation5 + $0xc0] sm:$0xff]
    %v68 = vld [vmem:[#allocation5 + $0xc8] sm:$0xff]
    %v69 = vld [vmem:[#allocation5 + $0xd0] sm:$0xff]
    %v70 = vld [vmem:[#allocation5 + $0xd8] sm:$0xff]
    %v71 = vld [vmem:[#allocation5 + $0xe0] sm:$0xff]
    %v72 = vld [vmem:[#allocation5 + $0xe8] sm:$0xff]
    %v73 = vld [vmem:[#allocation5 + $0xf0] sm:$0xff]
    %v74 = vld [vmem:[#allocation5 + $0xf8] sm:$0xff]
    %v75 = vld [vmem:[#allocation5 + $0x100] sm:$0xff]
    %v76 = vld [vmem:[#allocation5 + $0x108] sm:$0xff]
    %v77 = vld [vmem:[#allocation5 + $0x110] sm:$0xff]
    %v78 = vld [vmem:[#allocation5 + $0x118] sm:$0xff]
    %v79 = vld [vmem:[#allocation5 + $0x120] sm:$0xff]
    %v80 = vld [vmem:[#allocation5 + $0x128] sm:$0xff]
    %v81 = vld [vmem:[#allocation5 + $0x130] sm:$0xff]
    %v82 = vld [vmem:[#allocation5 + $0x138] sm:$0xff]
    %v83 = vld [vmem:[#allocation5 + $0x140] sm:$0xff]
    %v84 = vld [vmem:[#allocation5 + $0x148] sm:$0xff]
    %v85 = vld [vmem:[#allocation5 + $0x150] sm:$0xff]
    %v86 = vld [vmem:[#allocation5 + $0x158] sm:$0xff]
    %v87 = vld [vmem:[#allocation5 + $0x160] sm:$0xff]
    %v88 = vld [vmem:[#allocation5 + $0x168] sm:$0xff]
    %v89 = vld [vmem:[#allocation5 + $0x170] sm:$0xff]
    %v90 = vld [vmem:[#allocation5 + $0x178] sm:$0xff]
    %v91 = vld [vmem:[#allocation5 + $0x180] sm:$0xff]
    %v92 = vld [vmem:[#allocation5 + $0x188] sm:$0xff]
    %v93 = vld [vmem:[#allocation5 + $0x190] sm:$0xff]
    %v94 = vld [vmem:[#allocation5 + $0x198] sm:$0xff]
    %v95 = vld [vmem:[#allocation5 + $0x1a0] sm:$0xff]
    %v96 = vld [vmem:[#allocation5 + $0x1a8] sm:$0xff]
    %v97 = vld [vmem:[#allocation5 + $0x1b0] sm:$0xff]
    %v98 = vld [vmem:[#allocation5 + $0x1b8] sm:$0xff]
    %v99 = vld [vmem:[#allocation5 + $0x1c0] sm:$0xff]
    %v100 = vld [vmem:[#allocation5 + $0x1c8] sm:$0xff]
    %v101 = vld [vmem:[#allocation5 + $0x1d0] sm:$0xff]
    %v102 = vld [vmem:[#allocation5 + $0x1d8] sm:$0xff]
    %v103 = vld [vmem:[#allocation5 + $0x1e0] sm:$0xff]
    %v104 = vld [vmem:[#allocation5 + $0x1e8] sm:$0xff]
    %v105 = vld [vmem:[#allocation5 + $0x1f0] sm:$0xff]
    %v106 = vld [vmem:[#allocation5 + $0x1f8] sm:$0xff]
    %v107 = vld [vmem:[%s2] sm:$0x1]
    %v109 = vlaneseq
    %v110 = vshrl.u32 %v109, 7
    %v111 = vsub.s32 0, %v110
    %v112 = vrot.slane %v107, %v111
    %v116 = vcombine.high %v41, %v41
    %v117 = vcombine.high %v42, %v42
    %120 = vmatprep.subr.mxu0 0.0
    %121 = vmatpush1.msra.mxu0 %v58
    %122 = vmatprep.subr.mxu0 0.0
    %123 = vmatpush1.msra.mxu0 %v57
    %124 = vmatprep.subr.mxu0 0.0
    %125 = vmatpush1.msra.mxu0 %v56
    %126 = vmatprep.subr.mxu0 0.0
    %127 = vmatpush1.msra.mxu0 %v55
    %128 = vmatprep.subr.mxu0 0.0
    %129 = vmatpush1.msra.mxu0 %v54
    %130 = vmatprep.subr.mxu0 0.0
    %131 = vmatpush1.msra.mxu0 %v53
    %132 = vmatprep.subr.mxu0 0.0
    %133 = vmatpush1.msra.mxu0 %v52
    %134 = vmatprep.subr.mxu0 0.0
    %135 = vmatpush1.msra.mxu0 %v51
    %136 = vmatprep.subr.mxu0 0.0
    %137 = vmatpush1.msra.mxu0 %v50
    %138 = vmatprep.subr.mxu0 0.0
    %139 = vmatpush1.msra.mxu0 %v49
    %140 = vmatprep.subr.mxu0 0.0
    %141 = vmatpush1.msra.mxu0 %v48
    %142 = vmatprep.subr.mxu0 0.0
    %143 = vmatpush1.msra.mxu0 %v47
    %144 = vmatprep.subr.mxu0 0.0
    %145 = vmatpush1.msra.mxu0 %v46
    %146 = vmatprep.subr.mxu0 0.0
    %147 = vmatpush1.msra.mxu0 %v45
    %148 = vmatprep.subr.mxu0 0.0
    %149 = vmatpush1.msra.mxu0 %v44
    %150 = vmatprep.subr.mxu0 0.0
    %151 = vmatpush1.msra.mxu0 %v43
    %152 = vmatprep.subr.mxu0 0.0
    %153 = vmatpush2.msra.mxu0 %v74
    %154 = vmatprep.subr.mxu0 0.0
    %155 = vmatpush2.msra.mxu0 %v73
    %156 = vmatprep.subr.mxu0 0.0
    %157 = vmatpush2.msra.mxu0 %v72
    %158 = vmatprep.subr.mxu0 0.0
    %159 = vmatpush2.msra.mxu0 %v71
    %160 = vmatprep.subr.mxu0 0.0
    %161 = vmatpush2.msra.mxu0 %v70
    %162 = vmatprep.subr.mxu0 0.0
    %163 = vmatpush2.msra.mxu0 %v69
    %164 = vmatprep.subr.mxu0 0.0
    %165 = vmatpush2.msra.mxu0 %v68
    %166 = vmatprep.subr.mxu0 0.0
    %167 = vmatpush2.msra.mxu0 %v67
    %168 = vmatprep.subr.mxu0 0.0
    %169 = vmatpush2.msra.mxu0 %v66
    %170 = vmatprep.subr.mxu0 0.0
    %171 = vmatpush2.msra.mxu0 %v65
    %172 = vmatprep.subr.mxu0 0.0
    %173 = vmatpush2.msra.mxu0 %v64
    %174 = vmatprep.subr.mxu0 0.0
    %175 = vmatpush2.msra.mxu0 %v63
    %176 = vmatprep.subr.mxu0 0.0
    %177 = vmatpush2.msra.mxu0 %v62
    %178 = vmatprep.subr.mxu0 0.0
    %179 = vmatpush2.msra.mxu0 %v61
    %180 = vmatprep.subr.mxu0 0.0
    %181 = vmatpush2.msra.mxu0 %v60
    %182 = vmatprep.subr.mxu0 0.0
    %183 = vmatpush2.msra.mxu0 %v59
    %184 = vmatprep.mubr.f32.mxu0 %v116
    %185 = vmatmul.mubr.f32.gmra.mxu0 %v41
    %v186 = vpop.f32.mrf.mxu0
    %v187 = vadd.f32 %v112, %v186
    %v188 = vpop.f32.mrf.mxu0
    %189 = vdwg.mxu0
    %190 = vmatprep.subr.mxu0 0.0
    %191 = vmatpush1.msra.mxu0 %v90
    %192 = vmatprep.subr.mxu0 0.0
    %193 = vmatpush1.msra.mxu0 %v89
    %194 = vmatprep.subr.mxu0 0.0
    %195 = vmatpush1.msra.mxu0 %v88
    %196 = vmatprep.subr.mxu0 0.0
    %197 = vmatpush1.msra.mxu0 %v87
    %198 = vmatprep.subr.mxu0 0.0
    %199 = vmatpush1.msra.mxu0 %v86
    %200 = vmatprep.subr.mxu0 0.0
    %201 = vmatpush1.msra.mxu0 %v85
    %202 = vmatprep.subr.mxu0 0.0
    %203 = vmatpush1.msra.mxu0 %v84
    %204 = vmatprep.subr.mxu0 0.0
    %205 = vmatpush1.msra.mxu0 %v83
    %206 = vmatprep.subr.mxu0 0.0
    %207 = vmatpush1.msra.mxu0 %v82
    %208 = vmatprep.subr.mxu0 0.0
    %209 = vmatpush1.msra.mxu0 %v81
    %210 = vmatprep.subr.mxu0 0.0
    %211 = vmatpush1.msra.mxu0 %v80
    %212 = vmatprep.subr.mxu0 0.0
    %213 = vmatpush1.msra.mxu0 %v79
    %214 = vmatprep.subr.mxu0 0.0
    %215 = vmatpush1.msra.mxu0 %v78
    %216 = vmatprep.subr.mxu0 0.0
    %217 = vmatpush1.msra.mxu0 %v77
    %218 = vmatprep.subr.mxu0 0.0
    %219 = vmatpush1.msra.mxu0 %v76
    %220 = vmatprep.subr.mxu0 0.0
    %221 = vmatpush1.msra.mxu0 %v75
    %222 = vmatprep.subr.mxu0 0.0
    %223 = vmatpush2.msra.mxu0 %v106
    %224 = vmatprep.subr.mxu0 0.0
    %225 = vmatpush2.msra.mxu0 %v105
    %226 = vmatprep.subr.mxu0 0.0
    %227 = vmatpush2.msra.mxu0 %v104
    %228 = vmatprep.subr.mxu0 0.0
    %229 = vmatpush2.msra.mxu0 %v103
    %230 = vmatprep.subr.mxu0 0.0
    %231 = vmatpush2.msra.mxu0 %v102
    %232 = vmatprep.subr.mxu0 0.0
    %233 = vmatpush2.msra.mxu0 %v101
    %234 = vmatprep.subr.mxu0 0.0
    %235 = vmatpush2.msra.mxu0 %v100
    %236 = vmatprep.subr.mxu0 0.0
    %237 = vmatpush2.msra.mxu0 %v99
    %238 = vmatprep.subr.mxu0 0.0
    %239 = vmatpush2.msra.mxu0 %v98
    %240 = vmatprep.subr.mxu0 0.0
    %241 = vmatpush2.msra.mxu0 %v97
    %242 = vmatprep.subr.mxu0 0.0
    %243 = vmatpush2.msra.mxu0 %v96
    %244 = vmatprep.subr.mxu0 0.0
    %245 = vmatpush2.msra.mxu0 %v95
    %246 = vmatprep.subr.mxu0 0.0
    %247 = vmatpush2.msra.mxu0 %v94
    %248 = vmatprep.subr.mxu0 0.0
    %249 = vmatpush2.msra.mxu0 %v93
    %250 = vmatprep.subr.mxu0 0.0
    %251 = vmatpush2.msra.mxu0 %v92
    %252 = vmatprep.subr.mxu0 0.0
    %253 = vmatpush2.msra.mxu0 %v91
    %254 = vmatprep.mubr.f32.mxu0 %v117
    %255 = vmatmul.mubr.f32.gmra.mxu0 %v42
    %v256 = vpop.f32.mrf.mxu0
    %v257 = vadd.f32 %v187, %v256
    %v258 = vpop.f32.mrf.mxu0
    %259 = vdwg.mxu0
    %260 = vst [vmem:[#allocation7] sm:$0xf] %v257
    // Predicated region
    $region22: #{tpu_custom_call.1} parent=1 // pred_check
      _
    $region23: #{tpu_custom_call.1} parent=1 // pred_check_branch
      %262 = sbr.rel (0) target = $region25
    $region24: #{tpu_custom_call.1} parent=1 // pred_region
      %s264 = ssub.s32 64, 64
      %265 = vsyncadd [#allocation4], %s264
      %s267 = sshll.u32 [#allocation7], 4
      %s268 = int_to_ptr.vmem [resolvable:$true] %s267
      %270 = dma.vmem_to_hbm [thread:$0]  %s268, 64, %s3, [#allocation4]
    $region25: #{tpu_custom_call.1} parent=1 // pred_fallthru
      _
    // Predicated region
    $region26: #{tpu_custom_call.1} parent=1 // pred_check
      _
    $region27: #{tpu_custom_call.1} parent=1 // pred_check_branch
      %272 = sbr.rel (0) target = $region29
    $region28: #{tpu_custom_call.1} parent=1 // pred_region
      %273 = dma.done [#allocation4], 64
    $region29: #{tpu_custom_call.1} parent=1 // pred_fallthru
      _
    %274 = vsyncpa [#allocation3], 1
    %275 = vsyncpa [#allocation6], 1
    %276 = vsyncpa [#allocation4], 1

</llo_original>
